<compile_context>
chip_gen: v7x
topology: tpu7x:2x2x1
jax: 0.10.0
libtpu: 0.0.40
codegen_flags: <defaults>
</compile_context>

<pallas_src>
import jax
import jax.numpy as jnp
from jax.experimental import pallas as pl
from jax.experimental.pallas import tpu as pltpu

_LANE = 128  # lane width used to repack elementwise (sigmoid) work lane-dense


# ---------------------------------------------------------------------------
# Kernels
# ---------------------------------------------------------------------------
def _minmax_norm_kernel(x_ref, o_ref):
    """Per-row min-max normalization; constant rows / NaN rows -> 0.5."""
    x = x_ref[...].astype(jnp.float32)                     # (block_rows, F)
    max_v = jnp.max(x, axis=-1, keepdims=True)             # (block_rows, 1)
    min_v = jnp.min(x, axis=-1, keepdims=True)
    rng = max_v - min_v
    # Exact divide (mem-bound kernel; approx EUP reciprocal was not accurate enough).
    norm = (x - min_v) / rng
    # range==0 handles the constant-row 0/0 case explicitly; isnan keeps
    # torch.nan_to_num semantics for NaN inputs (whole row -> 0.5).
    bad = jnp.logical_or(rng == jnp.float32(0.0), jnp.isnan(norm))
    o_ref[...] = jnp.where(bad, jnp.float32(0.5), norm).astype(o_ref.dtype)


def _sigmoid_kernel(x_ref, o_ref):
    x = x_ref[...].astype(jnp.float32)
    o_ref[...] = jax.nn.sigmoid(x).astype(o_ref.dtype)


# ---------------------------------------------------------------------------
# Tiling helpers
# ---------------------------------------------------------------------------
def _round_up(x, m):
    return ((x + m - 1) // m) * m


def _choose_tiling(rows, feats, itemsize, max_block_rows=4096,
                   vmem_tile_budget_bytes=8 * 1024 * 1024):
    """Pick (block_rows, padded_rows): big tiles, multiple of 8, VMEM-safe, and
    >=2 grid steps when there is enough work (v7x has 2 TensorCores)."""
    # 2 double-buffered input buffers + 2 output buffers per tile.
    cap = max(8, vmem_tile_budget_bytes // max(1, feats * itemsize * 4))
    target = max(8, (min(max_block_rows, cap) // 8) * 8)
    if rows >= 16:
        n_blocks = max(pl.cdiv(rows, target), 2)
    else:
        n_blocks = 1
    block_rows = max(8, _round_up(pl.cdiv(rows, n_blocks), 8))
    padded_rows = n_blocks * block_rows
    return block_rows, padded_rows


def _call_rowwise(kernel, x2d, block_rows):
    """Run `kernel` over (rows, F); row axis tiled, feature axis a full block."""
    rows, feats = x2d.shape
    assert rows % block_rows == 0
    spec = pl.BlockSpec((block_rows, feats), lambda i: (i, 0))
    return pl.pallas_call(
        kernel,
        out_shape=jax.ShapeDtypeStruct((rows, feats), x2d.dtype),
        grid_spec=pltpu.PrefetchScalarGridSpec(
            num_scalar_prefetch=0,
            grid=(rows // block_rows,),
            in_specs=[spec],
            out_specs=spec,
        ),
        compiler_params=pltpu.CompilerParams(
            dimension_semantics=("parallel",)),
    )(x2d)


# ---------------------------------------------------------------------------
# Op wrappers (pad -> kernel -> slice)
# ---------------------------------------------------------------------------
def _minmax_normalize(x, max_block_rows=4096):
    f = x.shape[-1]
    x2d = x.reshape(-1, f)
    rows = x2d.shape[0]
    block_rows, padded_rows = _choose_tiling(rows, f, x2d.dtype.itemsize,
                                             max_block_rows)
    if padded_rows != rows:
        x2d = jnp.pad(x2d, ((0, padded_rows - rows), (0, 0)))
    y2d = _call_rowwise(_minmax_norm_kernel, x2d, block_rows)
    return y2d[:rows].reshape(x.shape)


def _sigmoid_elementwise(x, max_block_rows=4096):
    """Elementwise sigmoid; repack narrow tensors into a lane-dense (rows, 128) slab."""
    n = x.size
    flat = x.reshape(-1)
    rows0 = max(pl.cdiv(n, _LANE), 8)
    block_rows, padded_rows = _choose_tiling(rows0, _LANE, flat.dtype.itemsize,
                                             max_block_rows)
    total = padded_rows * _LANE
    if total != n:
        flat = jnp.pad(flat, (0, total - n))
    y2d = _call_rowwise(_sigmoid_kernel,
                        flat.reshape(padded_rows, _LANE), block_rows)
    return y2d.reshape(-1)[:n].reshape(x.shape)


# ---------------------------------------------------------------------------
# Module
# ---------------------------------------------------------------------------
class AggregatorInterfacePallas:
    """JAX/Pallas port of AggregatorInterface's concrete forward behavior."""

    def __init__(self, in_features, encoder_size, binary_stance_label=False,
                 normalize_in_vectors=True, max_block_rows=4096,
                 min_pallas_elems=4096):
        self.in_features = list(in_features)
        self.classification_size = 1 + int(binary_stance_label)
        self.encoder_size = encoder_size
        self.normalize_in_vectors = normalize_in_vectors
        self.max_block_rows = max_block_rows
        # below this element count, skip pallas_call launch overhead entirely
        self.min_pallas_elems = min_pallas_elems

    def forward(self, in_vectors):
        assert len(in_vectors) == len(self.in_features), (
            "Expected {} incoming tensors but got {}".format(
                len(self.in_features), len(in_vectors)))
        if not self.normalize_in_vectors:
            return list(in_vectors)
        out = []
        for i, num_features in enumerate(self.in_features):
            x = in_vectors[i]
            assert x.shape[-1] == num_features
            if x.size < self.min_pallas_elems:
                # tiny-tensor fallback: a pallas_call launch would dwarf the work
                if num_features <= 2:
                    out.append(jax.nn.sigmoid(x))
                else:
                    mx = jnp.max(x, axis=-1, keepdims=True)
                    mn = jnp.min(x, axis=-1, keepdims=True)
                    r = (x - mn) / (mx - mn)
                    out.append(jnp.where(jnp.isnan(r), 0.5, r))
                continue
            if num_features <= 2:
                out.append(_sigmoid_elementwise(x, self.max_block_rows))
            else:
                out.append(_minmax_normalize(x, self.max_block_rows))
        return out

    def post_process_stance_prediction(self, stance_prediction):
        if self.classification_size >= 2:
            # TODO(synk): softmax path left in plain jnp (last dim is 2; not worth a kernel).
            return jax.nn.softmax(stance_prediction, axis=-1)
        if stance_prediction.size < self.min_pallas_elems:
            return jax.nn.sigmoid(stance_prediction)[..., 0]
        return _sigmoid_elementwise(stance_prediction, self.max_block_rows)[..., 0]


# ---------------------------------------------------------------------------
# Pure-JAX reference (mirrors the PyTorch semantics)
# ---------------------------------------------------------------------------
def _ref_forward(in_vectors, in_features):
    out = []
    for i, f in enumerate(in_features):
        x = in_vectors[i]
        if f <= 2:
            out.append(jax.nn.sigmoid(x))
        else:
            mx = jnp.max(x, axis=-1, keepdims=True)
            mn = jnp.min(x, axis=-1, keepdims=True)
            r = (x - mn) / (mx - mn)
            out.append(jnp.where(jnp.isnan(r), 0.5, r))
    return out


if __name__ == "__main__":
    key = jax.random.PRNGKey(0)
    t_batch, u_batch = 2, 8
    in_features = [32, 2]            # one "rich" module, one tiny (sigmoid) module
    encoder_size = 16

    k0, k1, k2 = jax.random.split(key, 3)
    x0 = jax.random.normal(k0, (t_batch, u_batch, in_features[0]), dtype=jnp.float32)
    # exercise the constant-row (range == 0) path and the NaN-input path
    x0 = x0.at[0, 0, :].set(3.0)
    x0 = x0.at[1, 3, 5].set(jnp.nan)
    x1 = jax.random.normal(k1, (t_batch, u_batch, in_features[1]), dtype=jnp.float32)
    stance_logits = jax.random.normal(k2, (t_batch, u_batch, 1), dtype=jnp.float32)

    # min_pallas_elems=0 so the Pallas kernels are exercised even at demo sizes
    agg = AggregatorInterfacePallas(in_features, encoder_size,
                                    binary_stance_label=False,
                                    normalize_in_vectors=True,
                                    min_pallas_elems=0)

    outs = agg.forward([x0, x1])
    stance = agg.post_process_stance_prediction(stance_logits)
    jax.block_until_ready(outs)
    jax.block_until_ready(stance)

    # verify against the reference
    refs = _ref_forward([x0, x1], in_features)
    assert jnp.allclose(outs[0], refs[0], atol=1e-5), "min-max path mismatch"
    assert jnp.allclose(outs[1], refs[1], atol=1e-5), "sigmoid path mismatch"
    ref_stance = jax.nn.sigmoid(stance_logits)[..., 0]
    assert jnp.allclose(stance, ref_stance, atol=1e-5), "stance path mismatch"
    assert stance.shape == (t_batch, u_batch)
    assert outs[0].shape == x0.shape and outs[1].shape == x1.shape

    print("KERNEL_OK")
</pallas_src>

<mosaic_0001>
module attributes {stable_mosaic.version = 11 : i64} {
  func.func @_minmax_norm_kernel(%arg0: i32, %arg1: memref<8x32xf32, #tpu.memory_space<vmem>>, %arg2: memref<8x32xf32, #tpu.memory_space<vmem>>) attributes {dimension_semantics = [#tpu.dimension_semantics<parallel>], iteration_bounds = array<i64: 2>, scalar_prefetch = 0 : i64, scratch_operands = 0 : i64, tpu.core_type = #tpu.core_type<tc>, window_params = [{transform_indices = @transform_0, window_bounds = array<i64: 8, 32>}, {transform_indices = @transform_1, window_bounds = array<i64: 8, 32>}]} {
    %c0 = arith.constant 0 : index
    %c0_0 = arith.constant 0 : index
    %0 = vector.load %arg1[%c0, %c0_0] : memref<8x32xf32, #tpu.memory_space<vmem>>, vector<8x32xf32>
    %cst = arith.constant dense<0xFF800000> : vector<8xf32>
    %1 = vector.multi_reduction <maximumf>, %0, %cst [1] : vector<8x32xf32> to vector<8xf32>
    %2 = vector.shape_cast %1 : vector<8xf32> to vector<8x1xf32>
    %cst_1 = arith.constant dense<0x7F800000> : vector<8xf32>
    %3 = vector.multi_reduction <minimumf>, %0, %cst_1 [1] : vector<8x32xf32> to vector<8xf32>
    %4 = vector.shape_cast %3 : vector<8xf32> to vector<8x1xf32>
    %5 = arith.subf %2, %4 : vector<8x1xf32>
    %6 = vector.broadcast %4 : vector<8x1xf32> to vector<8x32xf32>
    %7 = arith.subf %0, %6 : vector<8x32xf32>
    %8 = vector.broadcast %5 : vector<8x1xf32> to vector<8x32xf32>
    %9 = arith.divf %7, %8 : vector<8x32xf32>
    %cst_2 = arith.constant 0.000000e+00 : f32
    %10 = vector.broadcast %cst_2 : f32 to vector<8x1xf32>
    %11 = arith.cmpf oeq, %5, %10 : vector<8x1xf32>
    %12 = arith.cmpf one, %9, %9 : vector<8x32xf32>
    %13 = vector.broadcast %11 : vector<8x1xi1> to vector<8x32xi1>
    %14 = arith.ori %13, %12 : vector<8x32xi1>
    %cst_3 = arith.constant 5.000000e-01 : f32
    %15 = vector.broadcast %cst_3 : f32 to vector<8x32xf32>
    %16 = arith.select %14, %15, %9 : vector<8x32xi1>, vector<8x32xf32>
    %c0_4 = arith.constant 0 : index
    %c0_5 = arith.constant 0 : index
    %17 = vector.load %arg2[%c0_4, %c0_5] : memref<8x32xf32, #tpu.memory_space<vmem>>, vector<8x32xf32>
    tpu.vector_store %arg2[%c0_4, %c0_5], %16 {strides = array<i32>} : memref<8x32xf32, #tpu.memory_space<vmem>>, vector<8x32xf32>,
    return
  }
  func.func @transform_0(%arg0: i32) -> (i32, i32) {
    %c0_i32 = arith.constant 0 : i32
    %c0_i32_0 = arith.constant 0 : i32
    return %arg0, %c0_i32 : i32, i32
  }
  func.func @transform_1(%arg0: i32) -> (i32, i32) {
    %c0_i32 = arith.constant 0 : i32
    %c0_i32_0 = arith.constant 0 : i32
    return %arg0, %c0_i32 : i32, i32
  }
}

</mosaic_0001>

<llo_original>
// kernel: tpu_custom_call.1
$region0: #{tpu_custom_call.1}
  #allocation0 [shape = 'u32[]', space=smem, size = 0x4, offset = 0x4, fixed_abs, tag = 'smem constant byte address 0x4 - core index']
  #allocation1 [shape = 'u32[144,128]{1,0:T(1,128)}', space=vmem, size = 0x12000, scoped, tag = 'internal scratch']
  %s0 = inlined_call_operand.hbm [shape: f32[16,32], index: 0, kind: input, shape index: {}]
  %s1 = inlined_call_operand.hbm [shape: f32[16,32], index: 1, kind: output, shape index: {}]
  %s2 = sld [smem:[#allocation0]]
  $region41: #{tpu_custom_call.1} parent=0
    _
  %s4 = ssub.s32 1, %s2
  %s5 = scalar_select 0, %s4, %s2
  $region1: #{tpu_custom_call.1} parent=0
    #allocation2 [shape = 'u8[8192]{0}', space=vmem, size = 0x2000, scoped, tag = 'input window, operand 0']
    #allocation3 [shape = 's32[2]{0}', space=sflag, size = 0x8, scoped, tag = 'scoped memory for tpu_custom_call.1']
    #allocation4 [shape = 's32[2]{0}', space=sflag, size = 0x8, scoped, tag = 'scoped memory for tpu_custom_call.1']
    #allocation5 [shape = 'u8[8192]{0}', space=vmem, size = 0x2000, scoped, tag = 'output window, operand 0']
    %6 = vsyncpa [#allocation3], 0
    %s7 = scalar_lea.sflag [#allocation3], 1
    %8 = vsyncpa %s7, 0
    %9 = vsyncpa [#allocation4], 0
    %s10 = scalar_lea.sflag [#allocation4], 1
    %11 = vsyncpa %s10, 0
    loop: start=0, step=1, limit=4
    $region2: #{tpu_custom_call.1} parent=1 // loop_pre_header
      _
    $region3: #{tpu_custom_call.1} parent=1 // loop_header
      %s13 = sphi 0, %s17
      %p14 = scmp.ge.s32.totalorder %s13, 4
      %s23 = sphi 0, %s25
      %s26 = sphi 0, %s23
      %s27 = sphi 0, %s26
      %s43 = sphi 0, %s27
      %s49 = sphi 0, %s51
      %s52 = sphi 0, %s49
      %s53 = sphi 0, %s52
      %s69 = sphi 0, %s53
    $region4: #{tpu_custom_call.1} parent=1 // loop_header_branch
      %16 = sbr.rel (%p14) target = $region8
    $region5: #{tpu_custom_call.1} parent=1 // loop_body
      %s18 = ssub.s32 %s13, 1
      %s19 = ssub.s32 %s13, 2
      %s20 = sadd.s32 %s13, 1
      %s21 = ssub.s32 %s13, %s20
      %p22 = scmp.eq.s32.totalorder %s21, 0
      %s24 = sadd.s32 %s23, 1
      %s25 = scalar_select %p22, %s23, %s24
      %p28 = pneg %p22
      %p29 = scmp.eq.s32.totalorder %s13, 1
      %p30 = por %p28, %p29
      %p31 = scmp.ne.s32.totalorder %s23, %s26
      %p32 = scmp.eq.s32.totalorder %s13, 0
      %p33 = por %p31, %p32
      %p34 = scmp.ne.s32.totalorder %s23, %s26
      %p35 = scmp.eq.s32.totalorder %s18, 1
      %p36 = por %p34, %p35
      %p37 = scmp.ne.s32.totalorder %s26, %s27
      %p38 = scmp.eq.s32.totalorder %s18, 0
      %p39 = por %p37, %p38
      %p40 = scmp.ne.s32.totalorder %s26, %s27
      %p41 = scmp.eq.s32.totalorder %s19, 1
      %p42 = por %p40, %p41
      %p44 = scmp.ne.s32.totalorder %s27, %s43
      %p45 = scmp.eq.s32.totalorder %s19, 0
      %p46 = por %p44, %p45
      %s47 = ssub.s32 %s13, %s20
      %p48 = scmp.eq.s32.totalorder %s47, 0
      %s50 = sadd.s32 %s49, 1
      %s51 = scalar_select %p48, %s49, %s50
      %p54 = pneg %p48
      %p55 = scmp.eq.s32.totalorder %s13, 1
      %p56 = por %p54, %p55
      %p57 = scmp.ne.s32.totalorder %s49, %s52
      %p58 = scmp.eq.s32.totalorder %s13, 0
      %p59 = por %p57, %p58
      %p60 = scmp.ne.s32.totalorder %s49, %s52
      %p61 = scmp.eq.s32.totalorder %s18, 1
      %p62 = por %p60, %p61
      %p63 = scmp.ne.s32.totalorder %s52, %s53
      %p64 = scmp.eq.s32.totalorder %s18, 0
      %p65 = por %p63, %p64
      %p66 = scmp.ne.s32.totalorder %s52, %s53
      %p67 = scmp.eq.s32.totalorder %s19, 1
      %p68 = por %p66, %p67
      %p70 = scmp.ne.s32.totalorder %s53, %s69
      %p71 = scmp.eq.s32.totalorder %s19, 0
      %p72 = por %p70, %p71
      %p73 = scmp.le.s32.totalorder 1, %s13
      %p74 = scmp.lt.s32.totalorder %s13, 3
      %p75 = pnand %p73, %p74
      %p76 = pneg %p75
      // Predicated region
      $region9: #{tpu_custom_call.1} parent=5 // pred_check
        _
      $region10: #{tpu_custom_call.1} parent=5 // pred_check_branch
        %78 = sbr.rel (%p75) target = $region12
      $region11: #{tpu_custom_call.1} parent=5 // pred_region
        %s79 = ssub.s32 %s13, 1
      $region12: #{tpu_custom_call.1} parent=5 // pred_fallthru
        _
      %p80 = scmp.lt.s32.totalorder %s13, 2
      // Predicated region
      $region13: #{tpu_custom_call.1} parent=5 // pred_check
        %p81 = pneg %p80
      $region14: #{tpu_custom_call.1} parent=5 // pred_check_branch
        %83 = sbr.rel (%p81) target = $region16
      $region15: #{tpu_custom_call.1} parent=5 // pred_region
        // Predicated region
        $region17: #{tpu_custom_call.1} parent=15 // pred_check
          %p84 = pneg %p33
        $region18: #{tpu_custom_call.1} parent=15 // pred_check_branch
          %86 = sbr.rel (%p84) target = $region20
        $region19: #{tpu_custom_call.1} parent=15 // pred_region
          %s87 = sand.u32 %s23, 1
          %s88 = scalar_lea.sflag [#allocation3], %s87
          %s89 = sand.u32 %s23, 1
          %s90 = smul.addr %s89, 8
          %s91 = scalar_lea.vmem [#allocation2], %s90
          %s93 = ssub.s32 128, 128
          %94 = vsyncadd %s88, %s93
          %s95 = smul.addr %s13, 128
          %s96 = scalar_lea.hbm %s0, %s95
          %s98 = sshll.u32 %s91, 4
          %s99 = int_to_ptr.vmem [resolvable:$true] %s98
          %101 = dma.hbm_to_vmem [thread:$0]  %s96, 128, %s99, %s88
        $region20: #{tpu_custom_call.1} parent=15 // pred_fallthru
          _
      $region16: #{tpu_custom_call.1} parent=5 // pred_fallthru
        _
      %p102 = scmp.le.s32.totalorder 1, %s13
      %p103 = scmp.lt.s32.totalorder %s13, 3
      %p104 = pnand %p102, %p103
      %p105 = pneg %p104
      // Predicated region
      $region21: #{tpu_custom_call.1} parent=5 // pred_check
        _
      $region22: #{tpu_custom_call.1} parent=5 // pred_check_branch
        %107 = sbr.rel (%p104) target = $region24
      $region23: #{tpu_custom_call.1} parent=5 // pred_region
        %s108 = ssub.s32 %s13, 1
        %s109 = sand.u32 %s26, 1
        %s110 = scalar_lea.sflag [#allocation3], %s109
        %s111 = sand.u32 %s26, 1
        %s112 = smul.addr %s111, 8
        %s113 = scalar_lea.vmem [#allocation2], %s112
        // Predicated region
        $region25: #{tpu_custom_call.1} parent=23 // pred_check
          %p114 = pneg %p39
        $region26: #{tpu_custom_call.1} parent=23 // pred_check_branch
          %116 = sbr.rel (%p114) target = $region28
        $region27: #{tpu_custom_call.1} parent=23 // pred_region
          %117 = dma.done %s110, 128
        $region28: #{tpu_custom_call.1} parent=23 // pred_fallthru
          _
        %s118 = sand.u32 %s26, 1
        %s119 = scalar_lea.sflag [#allocation3], %s118
        %s120 = sand.u32 %s26, 1
        %s121 = smul.addr %s120, 8
        %s122 = scalar_lea.vmem [#allocation2], %s121
        %p123 = pneg %p39
        %p124 = pneg %p36
        %p125 = pneg %p65
        %p126 = pneg %p62
        %s127 = sand.u32 %s52, 1
        %s128 = scalar_lea.sflag [#allocation4], %s127
        %s129 = sand.u32 %s52, 1
        %s130 = smul.addr %s129, 8
        %s131 = scalar_lea.vmem [#allocation5], %s130
        %v132 = vld [vmem:[%s113] sm:$0xff]
        %vm133 = vcmask 261120
        %v134 = vsel %vm133, %v132, -inf
        %135 = vmax.xlane.f32.xlu0 %v134
        %v136 = vpop.xlane.xlu0 %135
        %v137 = vsel %vm133, %v132, inf
        %138 = vmin.xlane.f32.xlu0 %v137
        %v139 = vpop.xlane.xlu0 %138
        %v140 = vsub.f32 %v136, %v139
        %v141 = vsub.f32 %v132, %v139
        %v142 = vrcp.pop %v140
        %v143 = vmul.f32 %v141, %v142
        %vm144 = vcmp.eq.f32.partialorder %v140, 0.0
        %vm145 = vcmp.ne.f32.partialorder %v143, %v143
        %v146 = vsel %vm144, 1, 0
        %vm147 = vcmp.eq.s32.totalorder %v146, 1
        %vm148 = vmor %vm147, %vm145
        %v149 = vsel %vm148, 0.5, %v143
        %150 = vst.msk [vmem:[%s131] sm:$0xff] %vm133, %v149
        %s151 = sand.u32 %s52, 1
        %s152 = scalar_lea.sflag [#allocation4], %s151
        %s153 = sand.u32 %s52, 1
        %s154 = smul.addr %s153, 8
        %s155 = scalar_lea.vmem [#allocation5], %s154
        // Predicated region
        $region29: #{tpu_custom_call.1} parent=23 // pred_check
          %p156 = pneg %p62
        $region30: #{tpu_custom_call.1} parent=23 // pred_check_branch
          %158 = sbr.rel (%p156) target = $region32
        $region31: #{tpu_custom_call.1} parent=23 // pred_region
          %s160 = ssub.s32 128, 128
          %161 = vsyncadd %s152, %s160
          %s162 = smul.addr %s18, 128
          %s163 = scalar_lea.hbm %s1, %s162
          %s165 = sshll.u32 %s155, 4
          %s166 = int_to_ptr.vmem [resolvable:$true] %s165
          %168 = dma.vmem_to_hbm [thread:$0]  %s166, 128, %s163, %s152
        $region32: #{tpu_custom_call.1} parent=23 // pred_fallthru
          _
      $region24: #{tpu_custom_call.1} parent=5 // pred_fallthru
        _
      %p169 = scmp.le.s32.totalorder 2, %s13
      // Predicated region
      $region33: #{tpu_custom_call.1} parent=5 // pred_check
        %p170 = pneg %p169
      $region34: #{tpu_custom_call.1} parent=5 // pred_check_branch
        %172 = sbr.rel (%p170) target = $region36
      $region35: #{tpu_custom_call.1} parent=5 // pred_region
        %s173 = ssub.s32 %s13, 2
        // Predicated region
        $region37: #{tpu_custom_call.1} parent=35 // pred_check
          %p174 = pneg %p68
        $region38: #{tpu_custom_call.1} parent=35 // pred_check_branch
          %176 = sbr.rel (%p174) target = $region40
        $region39: #{tpu_custom_call.1} parent=35 // pred_region
          %s177 = sand.u32 %s53, 1
          %s178 = scalar_lea.sflag [#allocation4], %s177
          %s179 = sand.u32 %s53, 1
          %s180 = smul.addr %s179, 8
          %s181 = scalar_lea.vmem [#allocation5], %s180
          %182 = dma.done %s178, 128
        $region40: #{tpu_custom_call.1} parent=35 // pred_fallthru
          _
      $region36: #{tpu_custom_call.1} parent=5 // pred_fallthru
        _
    $region6: #{tpu_custom_call.1} parent=1 // loop_footer
      %s17 = sadd.s32 1, %s13
    $region7: #{tpu_custom_call.1} parent=1 // loop_footer_branch
      %12 = sbr.rel target = $region3
    $region8: #{tpu_custom_call.1} parent=1 // loop_exit
      _
    %183 = vsyncpa [#allocation3], 1
    %s184 = scalar_lea.sflag [#allocation3], 1
    %185 = vsyncpa %s184, 1
    %186 = vsyncpa [#allocation4], 1
    %s187 = scalar_lea.sflag [#allocation4], 1
    %188 = vsyncpa %s187, 1

</llo_original>
